<compile_context>
chip_gen: v7x
topology: tpu7x:2x2x1
jax: 0.10.0
libtpu: 0.0.40
codegen_flags: <defaults>
</compile_context>

<pallas_src>
import functools

import jax
import jax.numpy as jnp
from jax import lax
from jax.experimental import pallas as pl
from jax.experimental.pallas import tpu as pltpu

_NEG = -1e30  # large-negative sentinel; behaves like -inf under the final relu


def _round_up(x, m):
    return ((x + m - 1) // m) * m


def _triplet_loss_kernel(im_ref, st_ref, d1m_ref, d2m_ref, out_ref,
                         acc_ref, colmax_ref, *, max_violation, b_real, has_pad):
    i = pl.program_id(0)
    n_tiles = pl.num_programs(0)
    tile_b = im_ref.shape[0]
    b_pad = st_ref.shape[1]

    @pl.when(i == 0)
    def _init():
        acc_ref[...] = jnp.zeros_like(acc_ref)
        if max_violation:
            colmax_ref[...] = jnp.full(colmax_ref.shape, _NEG, jnp.float32)

    # scores[r, c] = <im_row_r, s_c>; rhs pre-transposed in the wrapper so this
    # is the native (M,K)x(K,N) MXU contraction; bf16 operands, f32 accumulate.
    scores = jnp.dot(im_ref[...], st_ref[...],
                     preferred_element_type=jnp.float32)        # (tile_b, b_pad)

    # Diagonal / padding mask: (tile_b,1) row iota vs (1,b_pad) col iota
    # broadcast compare -> 1 full-size compare + 1 select (plus 2 ORs only when
    # padding exists), instead of the old ~9-op full-size chain.
    row_ids = lax.broadcasted_iota(jnp.int32, (tile_b, 1), 0) + i * tile_b
    col_ids = lax.broadcasted_iota(jnp.int32, (1, b_pad), 1)
    invalid = row_ids == col_ids
    if has_pad:
        invalid = invalid | (row_ids >= b_real) | (col_ids >= b_real)
    scores_m = jnp.where(invalid, jnp.float32(_NEG), scores)

    d1m = d1m_ref[...]            # (tile_b, 1) = diag - margin for this tile's rows

    if max_violation:
        # relu and max commute (relu monotone): reduce first, then two ops on a
        # (tile_b,1) vector -- cost_s is never materialized.
        row_max = jnp.max(scores_m, axis=1, keepdims=True)      # (tile_b, 1)
        acc_ref[...] += jnp.maximum(row_max - d1m, 0.0)
        # Deferred column max for cost_im, carried across row tiles.
        colmax_ref[...] = jnp.maximum(
            colmax_ref[...], jnp.max(scores_m, axis=0, keepdims=True))

        @pl.when(i == n_tiles - 1)
        def _finalize():
            d2m = d2m_ref[...]                                  # (1, b_pad)
            cost_im = jnp.maximum(colmax_ref[...] - d2m, 0.0)
            out_ref[0, 0] = jnp.sum(acc_ref[...]) + jnp.sum(cost_im)
    else:
        d2m = d2m_ref[...]                                      # (1, b_pad)
        cost = (jnp.maximum(scores_m - d1m, 0.0)
                + jnp.maximum(scores_m - d2m, 0.0))
        # Reduce only to a per-row vector; the scalar collapse + SMEM write
        # happens once on the last grid step (no per-step serializing RMW).
        acc_ref[...] += jnp.sum(cost, axis=1, keepdims=True)

        @pl.when(i == n_tiles - 1)
        def _finalize():
            out_ref[0, 0] = jnp.sum(acc_ref[...])


def _default_tile(b):
    kind = jax.devices()[0].device_kind.lower()
    # v4/v5 MXUs are 128x128 -> 128 row tiles; v6e/v7x have 256x256 MXUs.
    big = 128 if ("v4" in kind or "v5" in kind) else 256
    return _round_up(b, 8) if b <= big else big


def triplet_contrastive_loss(im, s, *, margin=0.2, max_violation=False, tile_b=None):
    """Pallas implementation of TripletContrastiveLoss.forward (measure='cosine')."""
    assert im.ndim == 2 and im.shape == s.shape
    b, d = im.shape

    tile_b = _default_tile(b) if tile_b is None else tile_b
    b_pad = _round_up(b, tile_b)
    n_tiles = b_pad // tile_b
    has_pad = b_pad != b

    if has_pad:
        pad = ((0, b_pad - b), (0, 0))
        im_p = jnp.pad(im, pad)
        s_p = jnp.pad(s, pad)
    else:
        im_p, s_p = im, s

    # Exact f32 diagonal of the score matrix (O(B*D) row-wise dot) with the
    # margin folded in, so the per-element kernel op is max(score - diag_m, 0).
    diag_m = (jnp.sum(im_p.astype(jnp.float32) * s_p.astype(jnp.float32), axis=1)
              - jnp.float32(margin))
    d1m = diag_m[:, None]          # (b_pad, 1) sublane-major, row-tiled
    d2m = diag_m[None, :]          # (1, b_pad) lane-major, resident

    # Pre-transpose the resident operand once (in HBM, amortized across tiles).
    s_t = s_p.T                    # (D, b_pad)

    kernel = functools.partial(
        _triplet_loss_kernel,
        max_violation=bool(max_violation),
        b_real=b,
        has_pad=has_pad,
    )

    itemsize = jnp.dtype(im.dtype).itemsize
    est_vmem = (2 * d * b_pad * itemsize          # resident s^T (worst case 2 bufs)
                + 2 * tile_b * d * itemsize       # im row tiles (double-buffered)
                + 2 * tile_b * 4 + 2 * b_pad * 4  # d1m tiles + d2m
                + 4 * tile_b * b_pad * 4          # f32 score/cost intermediates
                + tile_b * 4 + b_pad * 4)         # accumulator + colmax scratch
    vmem_limit = int(min(100 * 2**20, max(32 * 2**20, 2 * est_vmem)))

    cost = pl.CostEstimate(
        flops=2 * b_pad * b_pad * d + 6 * b_pad * b_pad,
        transcendentals=0,
        bytes_accessed=2 * b_pad * d * itemsize + 2 * b_pad * 4 + 4,
    )

    def build(single_buffer_invariants):
        def resident(shape):
            if single_buffer_invariants:
                # Grid-invariant operand: never re-fetched -> single buffer.
                return pl.BlockSpec(shape, lambda i: (0,) * len(shape),
                                    pipeline_mode=pl.Buffered(1))
            return pl.BlockSpec(shape, lambda i: (0,) * len(shape))

        return pl.pallas_call(
            kernel,
            out_shape=jax.ShapeDtypeStruct((1, 1), jnp.float32),
            grid=(n_tiles,),
            in_specs=[
                pl.BlockSpec((tile_b, d), lambda i: (i, 0)),   # im row tiles
                resident((d, b_pad)),                          # s^T resident
                pl.BlockSpec((tile_b, 1), lambda i: (i, 0)),   # diag-margin (rows)
                resident((1, b_pad)),                          # diag-margin (cols)
            ],
            out_specs=pl.BlockSpec(memory_space=pltpu.MemorySpace.SMEM),
            scratch_shapes=[
                pltpu.VMEM((tile_b, 1), jnp.float32),   # per-row partial sums
                pltpu.VMEM((1, b_pad), jnp.float32),    # running column max
            ],
            compiler_params=pltpu.CompilerParams(
                dimension_semantics=("arbitrary",),     # scalar-reduction axis
                vmem_limit_bytes=vmem_limit),
            cost_estimate=cost,
        )

    try:
        out = build(True)(im_p, s_t, d1m, d2m)
    except Exception:
        # Fallback if single-buffered invariants are not supported by this
        # jax/Mosaic build: default (double) buffering, same semantics.
        out = build(False)(im_p, s_t, d1m, d2m)
    return out[0, 0]


def _reference_loss(im, s, margin=0.2, max_violation=False):
    """Pure-JAX reference mirroring the PyTorch forward (computed in f32)."""
    im = im.astype(jnp.float32)
    s = s.astype(jnp.float32)
    scores = im @ s.T
    diag = jnp.diag(scores).reshape(-1, 1)
    cost_s = jnp.maximum(margin + scores - diag, 0.0)
    cost_im = jnp.maximum(margin + scores - diag.T, 0.0)
    eye = jnp.eye(scores.shape[0], dtype=bool)
    cost_s = jnp.where(eye, 0.0, cost_s)
    cost_im = jnp.where(eye, 0.0, cost_im)
    if max_violation:
        return jnp.sum(jnp.max(cost_s, axis=1)) + jnp.sum(jnp.max(cost_im, axis=0))
    return jnp.sum(cost_s) + jnp.sum(cost_im)


if __name__ == "__main__":
    key = jax.random.PRNGKey(0)
    k_im, k_s = jax.random.split(key)
    B, D = 8, 32
    # bf16 embeddings fed to the MXU in native dtype with f32 accumulation.
    im = jax.random.normal(k_im, (B, D), dtype=jnp.float32).astype(jnp.bfloat16)
    s = jax.random.normal(k_s, (B, D), dtype=jnp.float32).astype(jnp.bfloat16)

    ok = True
    for b_test in (8, 6):          # b=6 also exercises the padding/mask path
        im_t, s_t = im[:b_test], s[:b_test]
        for max_violation in (False, True):
            out = triplet_contrastive_loss(
                im_t, s_t, margin=0.2, max_violation=max_violation)
            jax.block_until_ready(out)
            ref = _reference_loss(
                im_t, s_t, margin=0.2, max_violation=max_violation)
            if not jnp.allclose(out, ref, atol=2e-3, rtol=2e-3):
                ok = False

    if ok:
        print("KERNEL_OK")
</pallas_src>

<mosaic_0001>
module attributes {stable_mosaic.version = 11 : i64} {
  func.func @_triplet_loss_kernel(%arg0: i32, %arg1: memref<8x32xbf16, #tpu.memory_space<vmem>>, %arg2: memref<32x8xbf16, #tpu.memory_space<vmem>>, %arg3: memref<8x1xf32, #tpu.memory_space<vmem>>, %arg4: memref<1x8xf32, #tpu.memory_space<vmem>>, %arg5: memref<1x1xf32, #tpu.memory_space<smem>>, %arg6: memref<8x1xf32, #tpu.memory_space<vmem>>, %arg7: memref<1x8xf32, #tpu.memory_space<vmem>>) attributes {dimension_semantics = [#tpu.dimension_semantics<arbitrary>], iteration_bounds = array<i64: 1>, scalar_prefetch = 0 : i64, scratch_operands = 2 : i64, tpu.core_type = #tpu.core_type<tc>, window_params = [{transform_indices = @transform_0, window_bounds = array<i64: 8, 32>}, {pipeline_mode = #tpu.pipeline_mode<synchronous>, transform_indices = @transform_1, window_bounds = array<i64: 32, 8>}, {transform_indices = @transform_2, window_bounds = array<i64: 8, 1>}, {pipeline_mode = #tpu.pipeline_mode<synchronous>, transform_indices = @transform_3, window_bounds = array<i64: 1, 8>}, {transform_indices = @transform_4, window_bounds = array<i64: 1, 1>}]} {
    %c0_i32 = arith.constant 0 : i32
    %0 = arith.cmpi eq, %arg0, %c0_i32 : i32
    %1 = arith.extui %0 : i1 to i32
    %c0_i32_0 = arith.constant 0 : i32
    %2 = arith.cmpi ne, %1, %c0_i32_0 : i32
    scf.if %2 {
      %cst_18 = arith.constant 0.000000e+00 : f32
      %35 = vector.broadcast %cst_18 : f32 to vector<8x1xf32>
      %c0_19 = arith.constant 0 : index
      %c0_20 = arith.constant 0 : index
      %36 = vector.load %arg6[%c0_19, %c0_20] : memref<8x1xf32, #tpu.memory_space<vmem>>, vector<8x1xf32>
      tpu.vector_store %arg6[%c0_19, %c0_20], %35 {strides = array<i32>} : memref<8x1xf32, #tpu.memory_space<vmem>>, vector<8x1xf32>,
    } else {
    }
    %c0 = arith.constant 0 : index
    %c0_1 = arith.constant 0 : index
    %3 = vector.load %arg1[%c0, %c0_1] : memref<8x32xbf16, #tpu.memory_space<vmem>>, vector<8x32xbf16>
    %c0_2 = arith.constant 0 : index
    %c0_3 = arith.constant 0 : index
    %4 = vector.load %arg2[%c0_2, %c0_3] : memref<32x8xbf16, #tpu.memory_space<vmem>>, vector<32x8xbf16>
    %cst = arith.constant dense<0.000000e+00> : vector<8x8xf32>
    %5 = tpu.matmul %3, %4, %cst {dimension_numbers = #tpu.dot_dimension_numbers<[1], [0], [0], [1], [0, 0, 1, 1], [], []>} : vector<8x32xbf16>, vector<32x8xbf16>, vector<8x8xf32> -> vector<8x8xf32>
    %6 = tpu.iota {dimensions = array<i32: 0>} : vector<8x1xi32>
    %c8_i32 = arith.constant 8 : i32
    %7 = arith.muli %arg0, %c8_i32 : i32
    %8 = vector.broadcast %7 : i32 to vector<8x1xi32>
    %9 = arith.addi %6, %8 : vector<8x1xi32>
    %10 = tpu.iota {dimensions = array<i32: 1>} : vector<1x8xi32>
    %11 = vector.broadcast %9 : vector<8x1xi32> to vector<8x8xi32>
    %12 = vector.broadcast %10 : vector<1x8xi32> to vector<8x8xi32>
    %13 = arith.cmpi eq, %11, %12 : vector<8x8xi32>
    %cst_4 = arith.constant -1.000000e+30 : f32
    %14 = vector.broadcast %cst_4 : f32 to vector<8x8xf32>
    %15 = arith.select %13, %14, %5 : vector<8x8xi1>, vector<8x8xf32>
    %c0_5 = arith.constant 0 : index
    %c0_6 = arith.constant 0 : index
    %16 = vector.load %arg3[%c0_5, %c0_6] : memref<8x1xf32, #tpu.memory_space<vmem>>, vector<8x1xf32>
    %c0_7 = arith.constant 0 : index
    %c0_8 = arith.constant 0 : index
    %17 = vector.load %arg4[%c0_7, %c0_8] : memref<1x8xf32, #tpu.memory_space<vmem>>, vector<1x8xf32>
    %18 = vector.broadcast %16 : vector<8x1xf32> to vector<8x8xf32>
    %19 = arith.subf %15, %18 : vector<8x8xf32>
    %cst_9 = arith.constant 0.000000e+00 : f32
    %20 = vector.broadcast %cst_9 : f32 to vector<8x8xf32>
    %21 = arith.maximumf %19, %20 : vector<8x8xf32>
    %22 = vector.broadcast %17 : vector<1x8xf32> to vector<8x8xf32>
    %23 = arith.subf %15, %22 : vector<8x8xf32>
    %cst_10 = arith.constant 0.000000e+00 : f32
    %24 = vector.broadcast %cst_10 : f32 to vector<8x8xf32>
    %25 = arith.maximumf %23, %24 : vector<8x8xf32>
    %26 = arith.addf %21, %25 : vector<8x8xf32>
    %c0_11 = arith.constant 0 : index
    %c0_12 = arith.constant 0 : index
    %27 = vector.load %arg6[%c0_11, %c0_12] : memref<8x1xf32, #tpu.memory_space<vmem>>, vector<8x1xf32>
    %cst_13 = arith.constant dense<0.000000e+00> : vector<8xf32>
    %28 = vector.multi_reduction <add>, %26, %cst_13 [1] : vector<8x8xf32> to vector<8xf32>
    %29 = vector.shape_cast %28 : vector<8xf32> to vector<8x1xf32>
    %30 = arith.addf %27, %29 : vector<8x1xf32>
    %c0_14 = arith.constant 0 : index
    %c0_15 = arith.constant 0 : index
    %31 = vector.load %arg6[%c0_14, %c0_15] : memref<8x1xf32, #tpu.memory_space<vmem>>, vector<8x1xf32>
    tpu.vector_store %arg6[%c0_14, %c0_15], %30 {strides = array<i32>} : memref<8x1xf32, #tpu.memory_space<vmem>>, vector<8x1xf32>,
    %c0_i32_16 = arith.constant 0 : i32
    %32 = arith.cmpi eq, %arg0, %c0_i32_16 : i32
    %33 = arith.extui %32 : i1 to i32
    %c0_i32_17 = arith.constant 0 : i32
    %34 = arith.cmpi ne, %33, %c0_i32_17 : i32
    scf.if %34 {
      %c0_18 = arith.constant 0 : index
      %c0_19 = arith.constant 0 : index
      %35 = vector.load %arg6[%c0_18, %c0_19] : memref<8x1xf32, #tpu.memory_space<vmem>>, vector<8x1xf32>
      %36 = vector.shape_cast %35 : vector<8x1xf32> to vector<1x8x1xf32>
      %cst_20 = arith.constant dense<0.000000e+00> : vector<1xf32>
      %37 = vector.multi_reduction <add>, %36, %cst_20 [1, 2] : vector<1x8x1xf32> to vector<1xf32>
      %38 = vector.shape_cast %37 : vector<1xf32> to vector<1x1x1xf32>
      %39 = vector.extract %38[0, 0, 0] : f32 from vector<1x1x1xf32>
      %c0_21 = arith.constant 0 : index
      %c0_22 = arith.constant 0 : index
      %40 = memref.load %arg5[%c0_21, %c0_22] : memref<1x1xf32, #tpu.memory_space<smem>>
      memref.store %39, %arg5[%c0_21, %c0_22] : memref<1x1xf32, #tpu.memory_space<smem>>
    } else {
    }
    return
  }
  func.func @transform_0(%arg0: i32) -> (i32, i32) {
    %c0_i32 = arith.constant 0 : i32
    %c0_i32_0 = arith.constant 0 : i32
    return %arg0, %c0_i32 : i32, i32
  }
  func.func @transform_1(%arg0: i32) -> (i32, i32) {
    %c0_i32 = arith.constant 0 : i32
    %c0_i32_0 = arith.constant 0 : i32
    %c0_i32_1 = arith.constant 0 : i32
    return %c0_i32, %c0_i32_0 : i32, i32
  }
  func.func @transform_2(%arg0: i32) -> (i32, i32) {
    %c0_i32 = arith.constant 0 : i32
    %c0_i32_0 = arith.constant 0 : i32
    return %arg0, %c0_i32 : i32, i32
  }
  func.func @transform_3(%arg0: i32) -> (i32, i32) {
    %c0_i32 = arith.constant 0 : i32
    %c0_i32_0 = arith.constant 0 : i32
    %c0_i32_1 = arith.constant 0 : i32
    return %c0_i32, %c0_i32_0 : i32, i32
  }
  func.func @transform_4(%arg0: i32) -> (i32, i32) {
    %c0_i32 = arith.constant 0 : i32
    %c0_i32_0 = arith.constant 0 : i32
    %c0_i32_1 = arith.constant 0 : i32
    return %c0_i32, %c0_i32_0 : i32, i32
  }
}

module attributes {stable_mosaic.version = 11 : i64} {
  func.func @_triplet_loss_kernel(%arg0: i32, %arg1: memref<8x32xbf16, #tpu.memory_space<vmem>>, %arg2: memref<32x8xbf16, #tpu.memory_space<vmem>>, %arg3: memref<8x1xf32, #tpu.memory_space<vmem>>, %arg4: memref<1x8xf32, #tpu.memory_space<vmem>>, %arg5: memref<1x1xf32, #tpu.memory_space<smem>>, %arg6: memref<8x1xf32, #tpu.memory_space<vmem>>, %arg7: memref<1x8xf32, #tpu.memory_space<vmem>>) attributes {dimension_semantics = [#tpu.dimension_semantics<arbitrary>], iteration_bounds = array<i64: 1>, scalar_prefetch = 0 : i64, scratch_operands = 2 : i64, tpu.core_type = #tpu.core_type<tc>, window_params = [{transform_indices = @transform_0, window_bounds = array<i64: 8, 32>}, {pipeline_mode = #tpu.pipeline_mode<synchronous>, transform_indices = @transform_1, window_bounds = array<i64: 32, 8>}, {transform_indices = @transform_2, window_bounds = array<i64: 8, 1>}, {pipeline_mode = #tpu.pipeline_mode<synchronous>, transform_indices = @transform_3, window_bounds = array<i64: 1, 8>}, {transform_indices = @transform_4, window_bounds = array<i64: 1, 1>}]} {
    %c0_i32 = arith.constant 0 : i32
    %0 = arith.cmpi eq, %arg0, %c0_i32 : i32
    %1 = arith.extui %0 : i1 to i32
    %c0_i32_0 = arith.constant 0 : i32
    %2 = arith.cmpi ne, %1, %c0_i32_0 : i32
    scf.if %2 {
      %cst_18 = arith.constant 0.000000e+00 : f32
      %35 = vector.broadcast %cst_18 : f32 to vector<8x1xf32>
      %c0_19 = arith.constant 0 : index
      %c0_20 = arith.constant 0 : index
      %36 = vector.load %arg6[%c0_19, %c0_20] : memref<8x1xf32, #tpu.memory_space<vmem>>, vector<8x1xf32>
      tpu.vector_store %arg6[%c0_19, %c0_20], %35 {strides = array<i32>} : memref<8x1xf32, #tpu.memory_space<vmem>>, vector<8x1xf32>,
    } else {
    }
    %c0 = arith.constant 0 : index
    %c0_1 = arith.constant 0 : index
    %3 = vector.load %arg1[%c0, %c0_1] : memref<8x32xbf16, #tpu.memory_space<vmem>>, vector<8x32xbf16>
    %c0_2 = arith.constant 0 : index
    %c0_3 = arith.constant 0 : index
    %4 = vector.load %arg2[%c0_2, %c0_3] : memref<32x8xbf16, #tpu.memory_space<vmem>>, vector<32x8xbf16>
    %cst = arith.constant dense<0.000000e+00> : vector<8x8xf32>
    %5 = tpu.matmul %3, %4, %cst {dimension_numbers = #tpu.dot_dimension_numbers<[1], [0], [0], [1], [0, 0, 1, 1], [], []>} : vector<8x32xbf16>, vector<32x8xbf16>, vector<8x8xf32> -> vector<8x8xf32>
    %6 = tpu.iota {dimensions = array<i32: 0>} : vector<8x1xi32>
    %c8_i32 = arith.constant 8 : i32
    %7 = arith.muli %arg0, %c8_i32 : i32
    %8 = vector.broadcast %7 : i32 to vector<8x1xi32>
    %9 = arith.addi %6, %8 : vector<8x1xi32>
    %10 = tpu.iota {dimensions = array<i32: 1>} : vector<1x8xi32>
    %11 = vector.broadcast %9 : vector<8x1xi32> to vector<8x8xi32>
    %12 = vector.broadcast %10 : vector<1x8xi32> to vector<8x8xi32>
    %13 = arith.cmpi eq, %11, %12 : vector<8x8xi32>
    %cst_4 = arith.constant -1.000000e+30 : f32
    %14 = vector.broadcast %cst_4 : f32 to vector<8x8xf32>
    %15 = arith.select %13, %14, %5 : vector<8x8xi1>, vector<8x8xf32>
    %c0_5 = arith.constant 0 : index
    %c0_6 = arith.constant 0 : index
    %16 = vector.load %arg3[%c0_5, %c0_6] : memref<8x1xf32, #tpu.memory_space<vmem>>, vector<8x1xf32>
    %c0_7 = arith.constant 0 : index
    %c0_8 = arith.constant 0 : index
    %17 = vector.load %arg4[%c0_7, %c0_8] : memref<1x8xf32, #tpu.memory_space<vmem>>, vector<1x8xf32>
    %18 = vector.broadcast %16 : vector<8x1xf32> to vector<8x8xf32>
    %19 = arith.subf %15, %18 : vector<8x8xf32>
    %cst_9 = arith.constant 0.000000e+00 : f32
    %20 = vector.broadcast %cst_9 : f32 to vector<8x8xf32>
    %21 = arith.maximumf %19, %20 : vector<8x8xf32>
    %22 = vector.broadcast %17 : vector<1x8xf32> to vector<8x8xf32>
    %23 = arith.subf %15, %22 : vector<8x8xf32>
    %cst_10 = arith.constant 0.000000e+00 : f32
    %24 = vector.broadcast %cst_10 : f32 to vector<8x8xf32>
    %25 = arith.maximumf %23, %24 : vector<8x8xf32>
    %26 = arith.addf %21, %25 : vector<8x8xf32>
    %c0_11 = arith.constant 0 : index
    %c0_12 = arith.constant 0 : index
    %27 = vector.load %arg6[%c0_11, %c0_12] : memref<8x1xf32, #tpu.memory_space<vmem>>, vector<8x1xf32>
    %cst_13 = arith.constant dense<0.000000e+00> : vector<8xf32>
    %28 = vector.multi_reduction <add>, %26, %cst_13 [1] : vector<8x8xf32> to vector<8xf32>
    %29 = vector.shape_cast %28 : vector<8xf32> to vector<8x1xf32>
    %30 = arith.addf %27, %29 : vector<8x1xf32>
    %c0_14 = arith.constant 0 : index
    %c0_15 = arith.constant 0 : index
    %31 = vector.load %arg6[%c0_14, %c0_15] : memref<8x1xf32, #tpu.memory_space<vmem>>, vector<8x1xf32>
    tpu.vector_store %arg6[%c0_14, %c0_15], %30 {strides = array<i32>} : memref<8x1xf32, #tpu.memory_space<vmem>>, vector<8x1xf32>,
    %c0_i32_16 = arith.constant 0 : i32
    %32 = arith.cmpi eq, %arg0, %c0_i32_16 : i32
    %33 = arith.extui %32 : i1 to i32
    %c0_i32_17 = arith.constant 0 : i32
    %34 = arith.cmpi ne, %33, %c0_i32_17 : i32
    scf.if %34 {
      %c0_18 = arith.constant 0 : index
      %c0_19 = arith.constant 0 : index
      %35 = vector.load %arg6[%c0_18, %c0_19] : memref<8x1xf32, #tpu.memory_space<vmem>>, vector<8x1xf32>
      %36 = vector.shape_cast %35 : vector<8x1xf32> to vector<1x8x1xf32>
      %cst_20 = arith.constant dense<0.000000e+00> : vector<1xf32>
      %37 = vector.multi_reduction <add>, %36, %cst_20 [1, 2] : vector<1x8x1xf32> to vector<1xf32>
      %38 = vector.shape_cast %37 : vector<1xf32> to vector<1x1x1xf32>
      %39 = vector.extract %38[0, 0, 0] : f32 from vector<1x1x1xf32>
      %c0_21 = arith.constant 0 : index
      %c0_22 = arith.constant 0 : index
      %40 = memref.load %arg5[%c0_21, %c0_22] : memref<1x1xf32, #tpu.memory_space<smem>>
      memref.store %39, %arg5[%c0_21, %c0_22] : memref<1x1xf32, #tpu.memory_space<smem>>
    } else {
    }
    return
  }
  func.func @transform_0(%arg0: i32) -> (i32, i32) {
    %c0_i32 = arith.constant 0 : i32
    %c0_i32_0 = arith.constant 0 : i32
    return %arg0, %c0_i32 : i32, i32
  }
  func.func @transform_1(%arg0: i32) -> (i32, i32) {
    %c0_i32 = arith.constant 0 : i32
    %c0_i32_0 = arith.constant 0 : i32
    %c0_i32_1 = arith.constant 0 : i32
    return %c0_i32, %c0_i32_0 : i32, i32
  }
  func.func @transform_2(%arg0: i32) -> (i32, i32) {
    %c0_i32 = arith.constant 0 : i32
    %c0_i32_0 = arith.constant 0 : i32
    return %arg0, %c0_i32 : i32, i32
  }
  func.func @transform_3(%arg0: i32) -> (i32, i32) {
    %c0_i32 = arith.constant 0 : i32
    %c0_i32_0 = arith.constant 0 : i32
    %c0_i32_1 = arith.constant 0 : i32
    return %c0_i32, %c0_i32_0 : i32, i32
  }
  func.func @transform_4(%arg0: i32) -> (i32, i32) {
    %c0_i32 = arith.constant 0 : i32
    %c0_i32_0 = arith.constant 0 : i32
    %c0_i32_1 = arith.constant 0 : i32
    return %c0_i32, %c0_i32_0 : i32, i32
  }
}

</mosaic_0001>

<llo_original>
// kernel: tpu_custom_call.1
$region0: #{tpu_custom_call.1}
  #allocation0 [shape = 'u32[]', space=smem, size = 0x4, offset = 0x4, fixed_abs, tag = 'smem constant byte address 0x4 - core index']
  #allocation1 [shape = 'u32[144,128]{1,0:T(1,128)}', space=vmem, size = 0x12000, scoped, tag = 'internal scratch']
  #allocation2 [shape = 'f32[8,1]{1,0:T(8,128)}', space=vmem, size = 0x1000, scoped, tag = 'scratch operand']
  #allocation3 [shape = 'f32[1,8]{1,0:T(1,128)}', space=vmem, size = 0x200, scoped, tag = 'scratch operand']
  %s0 = inlined_call_operand.vmem [shape: bf16[8,32], index: 0, kind: input, shape index: {}]
  %s1 = inlined_call_operand.vmem [shape: bf16[32,8], index: 1, kind: input, shape index: {}]
  %s2 = inlined_call_operand.vmem [shape: f32[8,1], index: 2, kind: input, shape index: {}]
  %s3 = inlined_call_operand.vmem [shape: f32[1,8], index: 3, kind: input, shape index: {}]
  %s4 = inlined_call_operand.hbm [shape: f32[1,1], index: 4, kind: output, shape index: {}]
  %s5 = sld [smem:[#allocation0]]
  $region34: #{tpu_custom_call.1} parent=0
    _
  %s7 = ssub.s32 1, %s5
  %s8 = scalar_select 0, %s7, %s5
  $region1: #{tpu_custom_call.1} parent=0
    #allocation4 [shape = 'u8[512]{0}', space=smem, size = 0x200, scoped, tag = 'output window, operand 0, single buffered']
    #allocation5 [shape = 's32[1]{0}', space=sflag, size = 0x4, scoped, tag = 'scoped memory for tpu_custom_call.1']
    %9 = vsyncpa [#allocation5], 0
    // Predicated region
    $region2: #{tpu_custom_call.1} parent=1 // pred_check
      _
    $region3: #{tpu_custom_call.1} parent=1 // pred_check_branch
      %11 = sbr.rel (0) target = $region5
    $region4: #{tpu_custom_call.1} parent=1 // pred_region
      _
    $region5: #{tpu_custom_call.1} parent=1 // pred_fallthru
      _
    // Predicated region
    $region6: #{tpu_custom_call.1} parent=1 // pred_check
      _
    $region7: #{tpu_custom_call.1} parent=1 // pred_check_branch
      %13 = sbr.rel (0) target = $region9
    $region8: #{tpu_custom_call.1} parent=1 // pred_region
      _
    $region9: #{tpu_custom_call.1} parent=1 // pred_fallthru
      _
    // Predicated region
    $region10: #{tpu_custom_call.1} parent=1 // pred_check
      _
    $region11: #{tpu_custom_call.1} parent=1 // pred_check_branch
      %15 = sbr.rel (0) target = $region13
    $region12: #{tpu_custom_call.1} parent=1 // pred_region
      _
    $region13: #{tpu_custom_call.1} parent=1 // pred_fallthru
      _
    // Predicated region
    $region14: #{tpu_custom_call.1} parent=1 // pred_check
      _
    $region15: #{tpu_custom_call.1} parent=1 // pred_check_branch
      %17 = sbr.rel (0) target = $region17
    $region16: #{tpu_custom_call.1} parent=1 // pred_region
      _
    $region17: #{tpu_custom_call.1} parent=1 // pred_fallthru
      _
    %p19 = scmp.eq.s32.totalorder 0, 0
    // Predicated region
    $region18: #{tpu_custom_call.1} parent=1 // pred_check
      %p20 = pneg %p19
    $region19: #{tpu_custom_call.1} parent=1 // pred_check_branch
      %22 = sbr.rel (%p20) target = $region21
    $region20: #{tpu_custom_call.1} parent=1 // pred_region
      %vm23 = vcmask 7168
      %24 = vst.msk [vmem:[#allocation2] sm:$0xff] %vm23, 0.0
    $region21: #{tpu_custom_call.1} parent=1 // pred_fallthru
      _
    %v25 = vld [vmem:[%s0] sm:$0xf]
    %v26 = vld [vmem:[%s1] sm:$0xf]
    %v27 = vld [vmem:[%s1 + $0x4] sm:$0xf]
    %v28 = vld [vmem:[%s1 + $0x8] sm:$0xf]
    %v29 = vld [vmem:[%s1 + $0xc] sm:$0xf]
    %v34 = vunpack.c.l.b16 %v26
    %v35 = vunpack.c.l.b16 %v27
    %v36 = vunpack.c.l.b16 %v28
    %v37 = vunpack.c.l.b16 %v29
    %v38 = vpack.c.b16 %v35, %v34
    %v39 = vpack.c.b16 %v37, %v36
    %vm42 = vcmask 261120
    %v44 = vsel %vm42, %v25, 0
    %46 = vmatprep.subr.bf16.mxu0 0
    %47 = vmatpush1.bf16.msra.mxu0 %v38
    %48 = vmatprep.subr.bf16.mxu0 0
    %49 = vmatpush1.bf16.msra.mxu0 %v39
    %50 = vmatprep.subr.bf16.mxu0 0
    %51 = vmatpush1.bf16.msra.mxu0 0
    %52 = vmatprep.subr.bf16.mxu0 0
    %53 = vmatpush1.bf16.msra.mxu0 0
    %54 = vmatprep.subr.bf16.mxu0 0
    %55 = vmatpush1.bf16.msra.mxu0 0
    %56 = vmatprep.subr.bf16.mxu0 0
    %57 = vmatpush1.bf16.msra.mxu0 0
    %58 = vmatprep.subr.bf16.mxu0 0
    %59 = vmatpush1.bf16.msra.mxu0 0
    %60 = vmatprep.subr.bf16.mxu0 0
    %61 = vmatpush1.bf16.msra.mxu0 0
    %62 = vmatprep.subr.bf16.mxu0 0
    %63 = vmatpush1.bf16.msra.mxu0 0
    %64 = vmatprep.subr.bf16.mxu0 0
    %65 = vmatpush1.bf16.msra.mxu0 0
    %66 = vmatprep.subr.bf16.mxu0 0
    %67 = vmatpush1.bf16.msra.mxu0 0
    %68 = vmatprep.subr.bf16.mxu0 0
    %69 = vmatpush1.bf16.msra.mxu0 0
    %70 = vmatprep.subr.bf16.mxu0 0
    %71 = vmatpush1.bf16.msra.mxu0 0
    %72 = vmatprep.subr.bf16.mxu0 0
    %73 = vmatpush1.bf16.msra.mxu0 0
    %74 = vmatprep.subr.bf16.mxu0 0
    %75 = vmatpush1.bf16.msra.mxu0 0
    %76 = vmatprep.subr.bf16.mxu0 0
    %77 = vmatpush1.bf16.msra.mxu0 0
    %78 = vmatprep.mubr.bf16.mxu0 0
    %79 = vmatmul.mubr.bf16.gmra.mrb[0].mxu0 %v44
    %v80 = vpop.f32.mrb[0].mxu0
    %v81 = vadd.f32 0.0, %v80
    %v82 = vpop.f32.mrb[0].mxu0
    %v83 = vpop.f32.mrb[0].mxu0
    %v84 = vpop.f32.mrb[0].mxu0
    %85 = vdwg.mxu0
    %v86 = vlaneseq
    %v87 = vshrl.u32 %v86, 7
    %s88 = smul.u32 0, 8
    %v89 = vstv %s88
    %v90 = vadd.s32 %v87, %v89
    %v91 = vlaneseq
    %v92 = vand.u32 %v91, 127
    %vm93 = vcmp.eq.s32.totalorder %v90, %v92
    %v94 = vsel %vm93, -1e+30, %v81
    %v95 = vld [vmem:[%s2] sm:$0xff]
    %v96 = vld [vmem:[%s3] sm:$0x1]
    %98 = vset.pattern.permute.xlu0 0
    %99 = vperm.xlu0 %98, %v95
    %v100 = vpop.permute.xlu0 %99
    %v102 = vsub.f32 %v94, %v100
    %v103 = vmax.f32 %v102, 0.0
    %v105 = vlaneseq
    %v106 = vshrl.u32 %v105, 7
    %v107 = vsub.s32 0, %v106
    %v108 = vrot.slane %v96, %v107
    %v110 = vsub.f32 %v94, %v108
    %v111 = vmax.f32 %v110, 0.0
    %v112 = vadd.f32 %v103, %v111
    %v113 = vld [vmem:[#allocation2] sm:$0xff]
    %vm114 = vcmask 64512
    %v115 = vsel %vm114, %v112, 0.0
    %116 = vadd.xlane.f32.xlu0 %v115
    %v117 = vpop.xlane.xlu0 %116
    %v118 = vadd.f32 %v113, %v117
    %vm119 = vcmask 7168
    %120 = vst.msk [vmem:[#allocation2] sm:$0xff] %vm119, %v118
    // Predicated region
    $region22: #{tpu_custom_call.1} parent=1 // pred_check
      %p121 = pneg %p19
    $region23: #{tpu_custom_call.1} parent=1 // pred_check_branch
      %123 = sbr.rel (%p121) target = $region25
    $region24: #{tpu_custom_call.1} parent=1 // pred_region
      %v124 = vld [vmem:[#allocation2] sm:$0xff]
      %v125 = vsel %vm119, %v124, 0.0
      %126 = vadd.xlane.f32.xlu0 %v125
      %v127 = vpop.xlane.xlu0 %126
      %v128 = vrot.slane %v127, 4
      %v129 = vadd.f32 %v127, %v128
      %v130 = vrot.slane %v129, 2
      %v131 = vadd.f32 %v129, %v130
      %v132 = vrot.slane %v131, 1
      %v133 = vadd.f32 %v131, %v132
      %s134 = vtos %v133
      %s135 = scalar_lea.smem [#allocation4], 0
      %136 = sst [smem:[%s135]] %s134
    $region25: #{tpu_custom_call.1} parent=1 // pred_fallthru
      _
    // Predicated region
    $region26: #{tpu_custom_call.1} parent=1 // pred_check
      _
    $region27: #{tpu_custom_call.1} parent=1 // pred_check_branch
      %138 = sbr.rel (0) target = $region29
    $region28: #{tpu_custom_call.1} parent=1 // pred_region
      %s140 = ssub.s32 16, 16
      %141 = vsyncadd [#allocation5], %s140
      %144 = dma.smem_to_hbm [#allocation4], 16, %s4, [#allocation5]
    $region29: #{tpu_custom_call.1} parent=1 // pred_fallthru
      _
    // Predicated region
    $region30: #{tpu_custom_call.1} parent=1 // pred_check
      _
    $region31: #{tpu_custom_call.1} parent=1 // pred_check_branch
      %146 = sbr.rel (0) target = $region33
    $region32: #{tpu_custom_call.1} parent=1 // pred_region
      %147 = dma.done [#allocation5], 16
    $region33: #{tpu_custom_call.1} parent=1 // pred_fallthru
      _
    %148 = sfence
    %149 = vsyncpa [#allocation5], 1

// kernel: tpu_custom_call.1
$region0: #{tpu_custom_call.1}
  #allocation0 [shape = 'u32[]', space=smem, size = 0x4, offset = 0x4, fixed_abs, tag = 'smem constant byte address 0x4 - core index']
  #allocation1 [shape = 'u32[144,128]{1,0:T(1,128)}', space=vmem, size = 0x12000, scoped, tag = 'internal scratch']
  #allocation2 [shape = 'f32[8,1]{1,0:T(8,128)}', space=vmem, size = 0x1000, scoped, tag = 'scratch operand']
  #allocation3 [shape = 'f32[1,8]{1,0:T(1,128)}', space=vmem, size = 0x200, scoped, tag = 'scratch operand']
  %s0 = inlined_call_operand.vmem [shape: bf16[8,32], index: 0, kind: input, shape index: {}]
  %s1 = inlined_call_operand.vmem [shape: bf16[32,8], index: 1, kind: input, shape index: {}]
  %s2 = inlined_call_operand.vmem [shape: f32[8,1], index: 2, kind: input, shape index: {}]
  %s3 = inlined_call_operand.vmem [shape: f32[1,8], index: 3, kind: input, shape index: {}]
  %s4 = inlined_call_operand.hbm [shape: f32[1,1], index: 4, kind: output, shape index: {}]
  %s5 = sld [smem:[#allocation0]]
  $region34: #{tpu_custom_call.1} parent=0
    _
  %s7 = ssub.s32 1, %s5
  %s8 = scalar_select 0, %s7, %s5
  $region1: #{tpu_custom_call.1} parent=0
    #allocation4 [shape = 'u8[512]{0}', space=smem, size = 0x200, scoped, tag = 'output window, operand 0, single buffered']
    #allocation5 [shape = 's32[1]{0}', space=sflag, size = 0x4, scoped, tag = 'scoped memory for tpu_custom_call.1']
    %9 = vsyncpa [#allocation5], 0
    // Predicated region
    $region2: #{tpu_custom_call.1} parent=1 // pred_check
      _
    $region3: #{tpu_custom_call.1} parent=1 // pred_check_branch
      %11 = sbr.rel (0) target = $region5
    $region4: #{tpu_custom_call.1} parent=1 // pred_region
      _
    $region5: #{tpu_custom_call.1} parent=1 // pred_fallthru
      _
    // Predicated region
    $region6: #{tpu_custom_call.1} parent=1 // pred_check
      _
    $region7: #{tpu_custom_call.1} parent=1 // pred_check_branch
      %13 = sbr.rel (0) target = $region9
    $region8: #{tpu_custom_call.1} parent=1 // pred_region
      _
    $region9: #{tpu_custom_call.1} parent=1 // pred_fallthru
      _
    // Predicated region
    $region10: #{tpu_custom_call.1} parent=1 // pred_check
      _
    $region11: #{tpu_custom_call.1} parent=1 // pred_check_branch
      %15 = sbr.rel (0) target = $region13
    $region12: #{tpu_custom_call.1} parent=1 // pred_region
      _
    $region13: #{tpu_custom_call.1} parent=1 // pred_fallthru
      _
    // Predicated region
    $region14: #{tpu_custom_call.1} parent=1 // pred_check
      _
    $region15: #{tpu_custom_call.1} parent=1 // pred_check_branch
      %17 = sbr.rel (0) target = $region17
    $region16: #{tpu_custom_call.1} parent=1 // pred_region
      _
    $region17: #{tpu_custom_call.1} parent=1 // pred_fallthru
      _
    %p19 = scmp.eq.s32.totalorder 0, 0
    // Predicated region
    $region18: #{tpu_custom_call.1} parent=1 // pred_check
      %p20 = pneg %p19
    $region19: #{tpu_custom_call.1} parent=1 // pred_check_branch
      %22 = sbr.rel (%p20) target = $region21
    $region20: #{tpu_custom_call.1} parent=1 // pred_region
      %vm23 = vcmask 7168
      %24 = vst.msk [vmem:[#allocation2] sm:$0xff] %vm23, 0.0
    $region21: #{tpu_custom_call.1} parent=1 // pred_fallthru
      _
    %v25 = vld [vmem:[%s0] sm:$0xf]
    %v26 = vld [vmem:[%s1] sm:$0xf]
    %v27 = vld [vmem:[%s1 + $0x4] sm:$0xf]
    %v28 = vld [vmem:[%s1 + $0x8] sm:$0xf]
    %v29 = vld [vmem:[%s1 + $0xc] sm:$0xf]
    %v34 = vunpack.c.l.b16 %v26
    %v35 = vunpack.c.l.b16 %v27
    %v36 = vunpack.c.l.b16 %v28
    %v37 = vunpack.c.l.b16 %v29
    %v38 = vpack.c.b16 %v35, %v34
    %v39 = vpack.c.b16 %v37, %v36
    %vm42 = vcmask 261120
    %v44 = vsel %vm42, %v25, 0
    %46 = vmatprep.subr.bf16.mxu0 0
    %47 = vmatpush1.bf16.msra.mxu0 %v38
    %48 = vmatprep.subr.bf16.mxu0 0
    %49 = vmatpush1.bf16.msra.mxu0 %v39
    %50 = vmatprep.subr.bf16.mxu0 0
    %51 = vmatpush1.bf16.msra.mxu0 0
    %52 = vmatprep.subr.bf16.mxu0 0
    %53 = vmatpush1.bf16.msra.mxu0 0
    %54 = vmatprep.subr.bf16.mxu0 0
    %55 = vmatpush1.bf16.msra.mxu0 0
    %56 = vmatprep.subr.bf16.mxu0 0
    %57 = vmatpush1.bf16.msra.mxu0 0
    %58 = vmatprep.subr.bf16.mxu0 0
    %59 = vmatpush1.bf16.msra.mxu0 0
    %60 = vmatprep.subr.bf16.mxu0 0
    %61 = vmatpush1.bf16.msra.mxu0 0
    %62 = vmatprep.subr.bf16.mxu0 0
    %63 = vmatpush1.bf16.msra.mxu0 0
    %64 = vmatprep.subr.bf16.mxu0 0
    %65 = vmatpush1.bf16.msra.mxu0 0
    %66 = vmatprep.subr.bf16.mxu0 0
    %67 = vmatpush1.bf16.msra.mxu0 0
    %68 = vmatprep.subr.bf16.mxu0 0
    %69 = vmatpush1.bf16.msra.mxu0 0
    %70 = vmatprep.subr.bf16.mxu0 0
    %71 = vmatpush1.bf16.msra.mxu0 0
    %72 = vmatprep.subr.bf16.mxu0 0
    %73 = vmatpush1.bf16.msra.mxu0 0
    %74 = vmatprep.subr.bf16.mxu0 0
    %75 = vmatpush1.bf16.msra.mxu0 0
    %76 = vmatprep.subr.bf16.mxu0 0
    %77 = vmatpush1.bf16.msra.mxu0 0
    %78 = vmatprep.mubr.bf16.mxu0 0
    %79 = vmatmul.mubr.bf16.gmra.mrb[0].mxu0 %v44
    %v80 = vpop.f32.mrb[0].mxu0
    %v81 = vadd.f32 0.0, %v80
    %v82 = vpop.f32.mrb[0].mxu0
    %v83 = vpop.f32.mrb[0].mxu0
    %v84 = vpop.f32.mrb[0].mxu0
    %85 = vdwg.mxu0
    %v86 = vlaneseq
    %v87 = vshrl.u32 %v86, 7
    %s88 = smul.u32 0, 8
    %v89 = vstv %s88
    %v90 = vadd.s32 %v87, %v89
    %v91 = vlaneseq
    %v92 = vand.u32 %v91, 127
    %vm93 = vcmp.eq.s32.totalorder %v90, %v92
    %v94 = vsel %vm93, -1e+30, %v81
    %v95 = vld [vmem:[%s2] sm:$0xff]
    %v96 = vld [vmem:[%s3] sm:$0x1]
    %98 = vset.pattern.permute.xlu0 0
    %99 = vperm.xlu0 %98, %v95
    %v100 = vpop.permute.xlu0 %99
    %v102 = vsub.f32 %v94, %v100
    %v103 = vmax.f32 %v102, 0.0
    %v105 = vlaneseq
    %v106 = vshrl.u32 %v105, 7
    %v107 = vsub.s32 0, %v106
    %v108 = vrot.slane %v96, %v107
    %v110 = vsub.f32 %v94, %v108
    %v111 = vmax.f32 %v110, 0.0
    %v112 = vadd.f32 %v103, %v111
    %v113 = vld [vmem:[#allocation2] sm:$0xff]
    %vm114 = vcmask 64512
    %v115 = vsel %vm114, %v112, 0.0
    %116 = vadd.xlane.f32.xlu0 %v115
    %v117 = vpop.xlane.xlu0 %116
    %v118 = vadd.f32 %v113, %v117
    %vm119 = vcmask 7168
    %120 = vst.msk [vmem:[#allocation2] sm:$0xff] %vm119, %v118
    // Predicated region
    $region22: #{tpu_custom_call.1} parent=1 // pred_check
      %p121 = pneg %p19
    $region23: #{tpu_custom_call.1} parent=1 // pred_check_branch
      %123 = sbr.rel (%p121) target = $region25
    $region24: #{tpu_custom_call.1} parent=1 // pred_region
      %v124 = vld [vmem:[#allocation2] sm:$0xff]
      %v125 = vsel %vm119, %v124, 0.0
      %126 = vadd.xlane.f32.xlu0 %v125
      %v127 = vpop.xlane.xlu0 %126
      %v128 = vrot.slane %v127, 4
      %v129 = vadd.f32 %v127, %v128
      %v130 = vrot.slane %v129, 2
      %v131 = vadd.f32 %v129, %v130
      %v132 = vrot.slane %v131, 1
      %v133 = vadd.f32 %v131, %v132
      %s134 = vtos %v133
      %s135 = scalar_lea.smem [#allocation4], 0
      %136 = sst [smem:[%s135]] %s134
    $region25: #{tpu_custom_call.1} parent=1 // pred_fallthru
      _
    // Predicated region
    $region26: #{tpu_custom_call.1} parent=1 // pred_check
      _
    $region27: #{tpu_custom_call.1} parent=1 // pred_check_branch
      %138 = sbr.rel (0) target = $region29
    $region28: #{tpu_custom_call.1} parent=1 // pred_region
      %s140 = ssub.s32 16, 16
      %141 = vsyncadd [#allocation5], %s140
      %144 = dma.smem_to_hbm [#allocation4], 16, %s4, [#allocation5]
    $region29: #{tpu_custom_call.1} parent=1 // pred_fallthru
      _
    // Predicated region
    $region30: #{tpu_custom_call.1} parent=1 // pred_check
      _
    $region31: #{tpu_custom_call.1} parent=1 // pred_check_branch
      %146 = sbr.rel (0) target = $region33
    $region32: #{tpu_custom_call.1} parent=1 // pred_region
      %147 = dma.done [#allocation5], 16
    $region33: #{tpu_custom_call.1} parent=1 // pred_fallthru
      _
    %148 = sfence
    %149 = vsyncpa [#allocation5], 1

</llo_original>
